<compile_context>
chip_gen: v6e
topology: v6e:2x2x1
jax: 0.10.0
libtpu: 0.0.40
codegen_flags: <defaults>
</compile_context>

<pallas_src>
import functools

import jax
import jax.numpy as jnp
from jax import lax
from jax.experimental import pallas as pl
from jax.experimental.pallas import tpu as pltpu

LANES = 128
MAX_BLOCK_ROWS = 4096          # 4096 * 128 * 4 B = 2 MiB per f32 block
_TWO_PI = 6.283185307179586


def _mix32(x):
    """lowbias32 integer hash (uint32 -> uint32), pure VPU ops."""
    x = x ^ (x >> jnp.uint32(16))
    x = x * jnp.uint32(0x7FEB352D)
    x = x ^ (x >> jnp.uint32(15))
    x = x * jnp.uint32(0x846CA68B)
    x = x ^ (x >> jnp.uint32(16))
    return x


def _gaussian_noise_kernel(seed_ref, x_ref, o_ref, *, sigma, block_rows, paired):
    lanes = x_ref.shape[-1]
    # In paired mode one hash serves TWO elements (cos -> row r, sin -> row
    # r + block_rows//2), so we only hash over half the rows.
    hash_rows = block_rows // 2 if paired else block_rows

    # Global linear element index of each "primary" (cos) element.
    # TODO(synk): widen to a (hi, lo) index pair if a single tensor can ever
    # exceed 2**32 elements (uint32 counter would wrap).
    pid = pl.program_id(0)
    base = lax.convert_element_type(pid, jnp.uint32) * jnp.uint32(block_rows * lanes)
    row_ids = lax.broadcasted_iota(jnp.uint32, (hash_rows, lanes), 0)
    lane_ids = lax.broadcasted_iota(jnp.uint32, (hash_rows, lanes), 1)
    idx = base + row_ids * jnp.uint32(lanes) + lane_ids

    # Counter-based RNG: one 32-bit hash per pair, keyed by (seed, global idx).
    seed = lax.convert_element_type(seed_ref[0], jnp.uint32)
    h = _mix32(idx ^ (seed * jnp.uint32(0x9E3779B9)))

    # Split the hash into two 16-bit uniforms via the mantissa-bitcast trick:
    # place the 16 bits in the top of the f32 mantissa, OR in exponent of 1.0,
    # bitcast -> value in [1, 2).  No int->float convert, no multiply.
    exp_one = jnp.uint32(0x3F800000)
    mant16 = jnp.uint32(0x007FFF80)
    u1_bits = ((h >> jnp.uint32(9)) & mant16) | exp_one    # high 16 bits of h
    u2_bits = ((h << jnp.uint32(7)) & mant16) | exp_one    # low 16 bits of h
    u1 = jnp.float32(2.0) - pltpu.bitcast(u1_bits, jnp.float32)   # (0, 1], log finite
    u2 = pltpu.bitcast(u2_bits, jnp.float32) - jnp.float32(1.0)   # [0, 1)

    # Box-Muller (EUP: log / sqrt / cos / sin — off the VALU critical slot).
    r = jnp.sqrt(jnp.float32(-2.0) * jnp.log(u1))
    theta = jnp.float32(_TWO_PI) * u2
    sig = jnp.float32(sigma)

    if paired:
        half = hash_rows  # multiple of 8 -> tile-aligned slices, no relayout
        gain_a = (jnp.float32(1.0) + sig * (r * jnp.cos(theta))).astype(o_ref.dtype)
        gain_b = (jnp.float32(1.0) + sig * (r * jnp.sin(theta))).astype(o_ref.dtype)
        # Multiply in the input's native dtype (bf16 stays packed on v6e/v7x).
        o_ref[:half, :] = x_ref[:half, :] * gain_a
        o_ref[half:, :] = x_ref[half:, :] * gain_b
    else:
        gain = (jnp.float32(1.0) + sig * (r * jnp.cos(theta))).astype(o_ref.dtype)
        o_ref[...] = x_ref[...] * gain


def _choose_block_rows(rows):
    """Pick (block_rows, paired). block_rows is a multiple of 16 when paired
    (so half-block slices stay on (8,128) tile boundaries) and is sized so the
    grid has >= 2 steps whenever possible (v7x megacore sharding)."""
    if rows < 16:
        return rows, False                      # tiny: full block, unpaired
    half_rows = (rows + 1) // 2                 # aim for >= 2 grid steps
    block_rows = min(MAX_BLOCK_ROWS, ((half_rows + 15) // 16) * 16)
    return block_rows, True


def gaussian_noise(x, seed, *, sigma=0.1, training=True, is_relative_detach=True):
    """JAX/Pallas equivalent of GaussianNoise.forward (training forward pass).

    x:    any-shape float array (NCHW feature maps typical).
    seed: int32 scalar; pass a fresh value per training step for fresh noise.
    """
    del is_relative_detach  # detach only affects gradients; forward identical.
    # TODO(synk): is_relative_detach only changes autograd (backward) behavior;
    # it is not representable in a forward-only Pallas kernel.
    if (not training) or sigma == 0:
        return x

    orig_shape = x.shape
    orig_dtype = x.dtype
    n = x.size
    if n == 0:
        return x

    flat = x.reshape(-1)
    main = (n // LANES) * LANES    # lane-dense prefix handled by the kernel
    rem = n - main                 # < 128 trailing elements (rare): plain jnp

    seed_arr = jnp.asarray([seed], dtype=jnp.int32)
    pieces = []

    if main:
        rows = main // LANES
        x2d = (flat if rem == 0 else flat[:main]).reshape(rows, LANES)
        block_rows, paired = _choose_block_rows(rows)
        grid = (pl.cdiv(rows, block_rows),)

        out2d = pl.pallas_call(
            functools.partial(
                _gaussian_noise_kernel,
                sigma=float(sigma),
                block_rows=block_rows,
                paired=paired,
            ),
            out_shape=jax.ShapeDtypeStruct((rows, LANES), orig_dtype),
            grid=grid,
            in_specs=[
                pl.BlockSpec(memory_space=pltpu.SMEM),                # seed scalar
                pl.BlockSpec((block_rows, LANES), lambda i: (i, 0)),  # x tile
            ],
            out_specs=pl.BlockSpec((block_rows, LANES), lambda i: (i, 0)),
            compiler_params=pltpu.CompilerParams(
                dimension_semantics=("parallel",),
                vmem_limit_bytes=32 * 1024 * 1024,  # v5e default is only 16 MiB
            ),
        )(seed_arr, x2d)

        main_out = out2d.reshape(-1)
        if rem == 0:
            return main_out.reshape(orig_shape)
        pieces.append(main_out)

    if rem:
        # Tiny (< 128 element) remainder: plain-jnp noise; avoids padding and
        # re-slicing the whole tensor around the kernel call.
        tail = flat[main:]
        tail_key = jax.random.fold_in(jax.random.PRNGKey(seed), 0x7A11)
        tail_noise = jax.random.normal(tail_key, (rem,), dtype=jnp.float32)
        tail_out = (
            tail.astype(jnp.float32) * (1.0 + float(sigma) * tail_noise)
        ).astype(orig_dtype)
        pieces.append(tail_out)

    out = pieces[0] if len(pieces) == 1 else jnp.concatenate(pieces)
    return out.reshape(orig_shape)


if __name__ == "__main__":
    key = jax.random.PRNGKey(0)
    # Small NCHW input consistent with a conv-style feature map.
    x = jax.random.normal(key, (2, 4, 16, 16), dtype=jnp.float32)

    y = gaussian_noise(x, seed=1234, sigma=0.1, training=True)
    y = jax.block_until_ready(y)

    # Shape/dtype preserved, values finite, noise actually applied.
    assert y.shape == x.shape and y.dtype == x.dtype
    assert bool(jnp.all(jnp.isfinite(y)))
    rel = jnp.abs(y - x) / (jnp.abs(x) + 1e-12)
    mean_rel = float(jnp.mean(rel))
    assert 0.0 < mean_rel < 1.0  # ~ sigma * E|N(0,1)| ≈ 0.08

    # Implied standard-normal noise should have roughly unit scale.
    mask = jnp.abs(x) > 0.1
    implied = jnp.where(mask, (y - x) / (0.1 * x), 0.0)
    std = float(jnp.sqrt(jnp.sum(implied**2) / jnp.maximum(jnp.sum(mask), 1)))
    assert 0.5 < std < 1.5

    # Eval mode / sigma == 0 must be identity.
    y_eval = jax.block_until_ready(
        gaussian_noise(x, seed=1234, sigma=0.1, training=False)
    )
    assert bool(jnp.all(y_eval == x))

    # Ragged-size path (remainder < 128 elements) stays correct.
    x_ragged = jax.random.normal(jax.random.PRNGKey(1), (3, 5, 7), dtype=jnp.float32)
    y_ragged = jax.block_until_ready(gaussian_noise(x_ragged, seed=7, sigma=0.1))
    assert y_ragged.shape == x_ragged.shape
    assert bool(jnp.all(jnp.isfinite(y_ragged)))

    print("KERNEL_OK")
</pallas_src>

<mosaic_0001>
module attributes {stable_mosaic.version = 11 : i64} {
  func.func @_gaussian_noise_kernel(%arg0: i32, %arg1: memref<1xi32, #tpu.memory_space<smem>>, %arg2: memref<16x128xf32, #tpu.memory_space<vmem>>, %arg3: memref<16x128xf32, #tpu.memory_space<vmem>>) attributes {dimension_semantics = [#tpu.dimension_semantics<parallel>], iteration_bounds = array<i64: 1>, scalar_prefetch = 0 : i64, scratch_operands = 0 : i64, tpu.core_type = #tpu.core_type<tc>, window_params = [{transform_indices = @transform_0, window_bounds = array<i64: 1>}, {transform_indices = @transform_1, window_bounds = array<i64: 16, 128>}, {transform_indices = @transform_2, window_bounds = array<i64: 16, 128>}]} {
    %c2048_i32 = arith.constant 2048 : i32
    %0 = arith.muli %arg0, %c2048_i32 : i32
    %1 = tpu.iota {dimensions = array<i32: 0>} : vector<8x128xi32>
    %2 = tpu.iota {dimensions = array<i32: 1>} : vector<8x128xi32>
    %c128_i32 = arith.constant 128 : i32
    %3 = vector.broadcast %c128_i32 : i32 to vector<8x128xi32>
    %4 = arith.muli %1, %3 : vector<8x128xi32>
    %5 = vector.broadcast %0 : i32 to vector<8x128xi32>
    %6 = arith.addi %5, %4 : vector<8x128xi32>
    %7 = arith.addi %6, %2 : vector<8x128xi32>
    %c0 = arith.constant 0 : index
    %8 = memref.load %arg1[%c0] : memref<1xi32, #tpu.memory_space<smem>>
    %c-1640531527_i32 = arith.constant -1640531527 : i32
    %9 = arith.muli %8, %c-1640531527_i32 : i32
    %10 = vector.broadcast %9 : i32 to vector<8x128xi32>
    %11 = arith.xori %7, %10 : vector<8x128xi32>
    %c16_i32 = arith.constant 16 : i32
    %12 = vector.broadcast %c16_i32 : i32 to vector<8x128xi32>
    %13 = arith.shrui %11, %12 : vector<8x128xi32>
    %14 = arith.xori %11, %13 : vector<8x128xi32>
    %c2146121005_i32 = arith.constant 2146121005 : i32
    %15 = vector.broadcast %c2146121005_i32 : i32 to vector<8x128xi32>
    %16 = arith.muli %14, %15 : vector<8x128xi32>
    %c15_i32 = arith.constant 15 : i32
    %17 = vector.broadcast %c15_i32 : i32 to vector<8x128xi32>
    %18 = arith.shrui %16, %17 : vector<8x128xi32>
    %19 = arith.xori %16, %18 : vector<8x128xi32>
    %c-2073254261_i32 = arith.constant -2073254261 : i32
    %20 = vector.broadcast %c-2073254261_i32 : i32 to vector<8x128xi32>
    %21 = arith.muli %19, %20 : vector<8x128xi32>
    %c16_i32_0 = arith.constant 16 : i32
    %22 = vector.broadcast %c16_i32_0 : i32 to vector<8x128xi32>
    %23 = arith.shrui %21, %22 : vector<8x128xi32>
    %24 = arith.xori %21, %23 : vector<8x128xi32>
    %c9_i32 = arith.constant 9 : i32
    %25 = vector.broadcast %c9_i32 : i32 to vector<8x128xi32>
    %26 = arith.shrui %24, %25 : vector<8x128xi32>
    %c8388480_i32 = arith.constant 8388480 : i32
    %27 = vector.broadcast %c8388480_i32 : i32 to vector<8x128xi32>
    %28 = arith.andi %26, %27 : vector<8x128xi32>
    %c1065353216_i32 = arith.constant 1065353216 : i32
    %29 = vector.broadcast %c1065353216_i32 : i32 to vector<8x128xi32>
    %30 = arith.ori %28, %29 : vector<8x128xi32>
    %c7_i32 = arith.constant 7 : i32
    %31 = vector.broadcast %c7_i32 : i32 to vector<8x128xi32>
    %32 = arith.shli %24, %31 : vector<8x128xi32>
    %c8388480_i32_1 = arith.constant 8388480 : i32
    %33 = vector.broadcast %c8388480_i32_1 : i32 to vector<8x128xi32>
    %34 = arith.andi %32, %33 : vector<8x128xi32>
    %c1065353216_i32_2 = arith.constant 1065353216 : i32
    %35 = vector.broadcast %c1065353216_i32_2 : i32 to vector<8x128xi32>
    %36 = arith.ori %34, %35 : vector<8x128xi32>
    %37 = tpu.bitcast %30 : vector<8x128xi32> -> vector<8x128xf32>
    %cst = arith.constant 2.000000e+00 : f32
    %38 = vector.broadcast %cst : f32 to vector<8x128xf32>
    %39 = arith.subf %38, %37 : vector<8x128xf32>
    %40 = tpu.bitcast %36 : vector<8x128xi32> -> vector<8x128xf32>
    %cst_3 = arith.constant 1.000000e+00 : f32
    %41 = vector.broadcast %cst_3 : f32 to vector<8x128xf32>
    %42 = arith.subf %40, %41 : vector<8x128xf32>
    %43 = math.log %39 : vector<8x128xf32>
    %cst_4 = arith.constant -2.000000e+00 : f32
    %44 = vector.broadcast %cst_4 : f32 to vector<8x128xf32>
    %45 = arith.mulf %44, %43 : vector<8x128xf32>
    %46 = math.sqrt %45 : vector<8x128xf32>
    %cst_5 = arith.constant 6.28318548 : f32
    %47 = vector.broadcast %cst_5 : f32 to vector<8x128xf32>
    %48 = arith.mulf %47, %42 : vector<8x128xf32>
    %49 = math.cos %48 : vector<8x128xf32>
    %50 = arith.mulf %46, %49 : vector<8x128xf32>
    %cst_6 = arith.constant 1.000000e-01 : f32
    %51 = vector.broadcast %cst_6 : f32 to vector<8x128xf32>
    %52 = arith.mulf %51, %50 : vector<8x128xf32>
    %cst_7 = arith.constant 1.000000e+00 : f32
    %53 = vector.broadcast %cst_7 : f32 to vector<8x128xf32>
    %54 = arith.addf %53, %52 : vector<8x128xf32>
    %55 = math.sin %48 : vector<8x128xf32>
    %56 = arith.mulf %46, %55 : vector<8x128xf32>
    %cst_8 = arith.constant 1.000000e-01 : f32
    %57 = vector.broadcast %cst_8 : f32 to vector<8x128xf32>
    %58 = arith.mulf %57, %56 : vector<8x128xf32>
    %cst_9 = arith.constant 1.000000e+00 : f32
    %59 = vector.broadcast %cst_9 : f32 to vector<8x128xf32>
    %60 = arith.addf %59, %58 : vector<8x128xf32>
    %c0_10 = arith.constant 0 : index
    %c0_11 = arith.constant 0 : index
    %61 = vector.load %arg2[%c0_10, %c0_11] : memref<16x128xf32, #tpu.memory_space<vmem>>, vector<8x128xf32>
    %62 = arith.mulf %61, %54 : vector<8x128xf32>
    %c0_12 = arith.constant 0 : index
    %c0_13 = arith.constant 0 : index
    %63 = vector.load %arg3[%c0_12, %c0_13] : memref<16x128xf32, #tpu.memory_space<vmem>>, vector<8x128xf32>
    tpu.vector_store %arg3[%c0_12, %c0_13], %62 {strides = array<i32>} : memref<16x128xf32, #tpu.memory_space<vmem>>, vector<8x128xf32>,
    %c8 = arith.constant 8 : index
    %c0_14 = arith.constant 0 : index
    %64 = vector.load %arg2[%c8, %c0_14] : memref<16x128xf32, #tpu.memory_space<vmem>>, vector<8x128xf32>
    %65 = arith.mulf %64, %60 : vector<8x128xf32>
    %c8_15 = arith.constant 8 : index
    %c0_16 = arith.constant 0 : index
    %66 = vector.load %arg3[%c8_15, %c0_16] : memref<16x128xf32, #tpu.memory_space<vmem>>, vector<8x128xf32>
    tpu.vector_store %arg3[%c8_15, %c0_16], %65 {strides = array<i32>} : memref<16x128xf32, #tpu.memory_space<vmem>>, vector<8x128xf32>,
    return
  }
  func.func @transform_0(%arg0: i32) -> i32 {
    %c0_i32 = arith.constant 0 : i32
    %c0_i32_0 = arith.constant 0 : i32
    return %c0_i32 : i32
  }
  func.func @transform_1(%arg0: i32) -> (i32, i32) {
    %c0_i32 = arith.constant 0 : i32
    %c0_i32_0 = arith.constant 0 : i32
    return %arg0, %c0_i32 : i32, i32
  }
  func.func @transform_2(%arg0: i32) -> (i32, i32) {
    %c0_i32 = arith.constant 0 : i32
    %c0_i32_0 = arith.constant 0 : i32
    return %arg0, %c0_i32 : i32, i32
  }
}

</mosaic_0001>

<llo_original>
// kernel: tpu_custom_call.1
$region0: #{tpu_custom_call.1}
  #allocation0 [shape = 'u32[]', space=smem, size = 0x4, offset = 0x4, fixed_abs, tag = 'smem constant byte address 0x4 - core index']
  #allocation1 [shape = 'u32[144,128]{1,0:T(1,128)}', space=vmem, size = 0x12000, scoped, tag = 'internal scratch']
  #allocation2 [shape = 's32[1]{0:T(128)S(6)}', space=smem, size = 0x200, scoped, tag = 'scoped memory for tpu_custom_call.1']
  %s0 = inlined_call_operand.<no memory space> [shape: s32[1], index: 0, kind: input, shape index: {}]
  %s1 = inlined_call_operand.hbm [shape: f32[16,128], index: 1, kind: input, shape index: {}]
  %s2 = inlined_call_operand.hbm [shape: f32[16,128], index: 2, kind: output, shape index: {}]
  %s3 = sld [smem:[#allocation0]]
  $region22: #{tpu_custom_call.1} parent=0
    _
  %s5 = ssub.s32 1, %s3
  %s6 = scalar_select 0, %s5, %s3
  %7 = sst [smem:[#allocation2]] %s0
  $region1: #{tpu_custom_call.1} parent=0
    #allocation3 [shape = 'u8[8192]{0}', space=vmem, size = 0x2000, scoped, tag = 'input window, operand 1, single buffered']
    #allocation4 [shape = 's32[1]{0}', space=sflag, size = 0x4, scoped, tag = 'scoped memory for tpu_custom_call.1']
    #allocation5 [shape = 's32[1]{0}', space=sflag, size = 0x4, scoped, tag = 'scoped memory for tpu_custom_call.1']
    #allocation6 [shape = 'u8[8192]{0}', space=vmem, size = 0x2000, scoped, tag = 'output window, operand 0, single buffered']
    %8 = vsyncpa [#allocation4], 0
    %9 = vsyncpa [#allocation5], 0
    // Predicated region
    $region2: #{tpu_custom_call.1} parent=1 // pred_check
      _
    $region3: #{tpu_custom_call.1} parent=1 // pred_check_branch
      %11 = sbr.rel (0) target = $region5
    $region4: #{tpu_custom_call.1} parent=1 // pred_region
      _
    $region5: #{tpu_custom_call.1} parent=1 // pred_fallthru
      _
    // Predicated region
    $region6: #{tpu_custom_call.1} parent=1 // pred_check
      _
    $region7: #{tpu_custom_call.1} parent=1 // pred_check_branch
      %13 = sbr.rel (0) target = $region9
    $region8: #{tpu_custom_call.1} parent=1 // pred_region
      %s15 = ssub.s32 256, 256
      %16 = vsyncadd [#allocation4], %s15
      %s17 = sshll.u32 [#allocation3], 4
      %s18 = int_to_ptr.vmem [resolvable:$true] %s17
      %23 = dma.hbm_to_vmem [thread:$0]  %s1, 256, %s18, [#allocation4], 128, 128, 8
    $region9: #{tpu_custom_call.1} parent=1 // pred_fallthru
      _
    // Predicated region
    $region10: #{tpu_custom_call.1} parent=1 // pred_check
      _
    $region11: #{tpu_custom_call.1} parent=1 // pred_check_branch
      %25 = sbr.rel (0) target = $region13
    $region12: #{tpu_custom_call.1} parent=1 // pred_region
      %26 = dma.done [#allocation4], 256
    $region13: #{tpu_custom_call.1} parent=1 // pred_fallthru
      _
    %s27 = smul.u32 0, 2048
    %v28 = vlaneseq
    %v29 = vshrl.u32 %v28, 7
    %v30 = vlaneseq
    %v31 = vand.u32 %v30, 127
    %v32 = vmul.u32 %v29, 128
    %v33 = vstv %s27
    %v34 = vadd.s32 %v33, %v32
    %v35 = vadd.s32 %v34, %v31
    %s36 = sld [smem:[#allocation2]]
    %s37 = smul.u32 %s36, 2654435769
    %v38 = vstv %s37
    %v39 = vxor.u32 %v35, %v38
    %v40 = vshrl.u32 %v39, 16
    %v41 = vxor.u32 %v39, %v40
    %v42 = vmul.u32 %v41, 2146121005
    %v43 = vshrl.u32 %v42, 15
    %v44 = vxor.u32 %v42, %v43
    %v45 = vmul.u32 %v44, 2221713035
    %v46 = vshrl.u32 %v45, 16
    %v47 = vxor.u32 %v45, %v46
    %v48 = vshrl.u32 %v47, 9
    %v49 = vand.u32 %v48, 8388480
    %v50 = vor.u32 %v49, 1065353216
    %v51 = vshll.u32 %v47, 7
    %v52 = vand.u32 %v51, 8388480
    %v53 = vor.u32 %v52, 1065353216
    %v55 = vsub.f32 2.0, %v50
    %v57 = vsub.f32 %v53, 1.0
    %v58 = vlog2.pop %v55
    %v59 = vmul.f32 %v58, 0.6931472
    %v60 = vmul.f32 %v59, -2.0
    %v61 = vrsqrt.pop %v60
    %v62 = vmul.f32 %v60, %v61
    %vm63 = vcmp.eq.f32.partialorder %v60, inf
    %v64 = vsel %vm63, %v60, %v62
    %vm65 = vcmp.eq.f32.partialorder %v60, 0.0
    %v66 = vand.u32 %v60, 2147483648
    %v67 = vsel %vm65, %v66, %v64
    %v68 = vmul.f32 %v57, 6.2831855
    %v69 = vand.u32 2147483647, %v68
    %vm70 = vcmp.le.f32.partialorder %v69, 0.7853982
    %vm71 = vcmp.lt.s32.totalorder %v68, 0
    %v72 = vand.u32 %v68, 2139095040
    %v73 = vshrl.u32 %v72, 23
    %v74 = vsub.s32 %v73, 127
    %v75 = vand.u32 2147483647, %v68
    %v76 = vand.u32 %v75, 8388607
    %v77 = vor.u32 %v76, 8388608
    %v78 = vsub.s32 0, %v77
    %v79 = vadd.s32 %v74, 1
    %vm80 = vcmp.gt.s32.totalorder %v79, 0
    %v81 = vsel %vm80, %v79, 0
    %v82 = vshrl.u32 %v81, 5
    %v83 = vand.u32 %v81, 31
    %v84 = vsub.s32 32, %v83
    %v85 = vshrl.u32 683565275, %v84
    %v86 = vshll.u32 683565275, %v83
    %v87 = vshrl.u32 2475754826, %v84
    %v88 = vor.u32 %v86, %v87
    %v89 = vshll.u32 2475754826, %v83
    %v90 = vshrl.u32 2131351028, %v84
    %v91 = vor.u32 %v89, %v90
    %v92 = vshll.u32 2131351028, %v83
    %v93 = vshrl.u32 2102212464, %v84
    %v94 = vor.u32 %v92, %v93
    %v95 = vshll.u32 2102212464, %v83
    %v96 = vshrl.u32 920167782, %v84
    %v97 = vor.u32 %v95, %v96
    %v98 = vshll.u32 920167782, %v83
    %v99 = vshrl.u32 1326507024, %v84
    %v100 = vor.u32 %v98, %v99
    %vm101 = vcmp.lt.s32.totalorder %v82, 1
    %vm102 = vcmp.lt.s32.totalorder %v82, 2
    %vm103 = vcmp.lt.s32.totalorder %v82, 3
    %vm104 = vcmp.lt.s32.totalorder %v82, 4
    %v105 = vsel %vm101, %v85, %v88
    %v106 = vsel %vm104, %v94, 2102212464
    %v107 = vsel %vm103, %v91, %v106
    %v108 = vsel %vm102, %v105, %v107
    %v109 = vsel %vm101, %v88, %v91
    %v110 = vsel %vm104, %v97, 920167782
    %v111 = vsel %vm103, %v94, %v110
    %v112 = vsel %vm102, %v109, %v111
    %v113 = vsel %vm101, %v91, %v94
    %v114 = vsel %vm104, %v100, 1326507024
    %v115 = vsel %vm103, %v97, %v114
    %v116 = vsel %vm102, %v113, %v115
    %v117 = vshll.u32 %v77, 8
    %v118 = vmul.u32.u64.compose %v117, %v116
    %v119 = vextract.low.u32 %v118
    %v120 = vextract.high.u32 %v118
    %v121 = vmul.u32.u64.compose %v117, %v112
    %v122 = vextract.low.u32 %v121
    %v123 = vextract.high.u32 %v121
    %v124 = vmul.u32 %v117, %v108
    %v125 = vadd.s32 %v120, %v122
    %vm126 = vc.u32 %v120, %v122
    %v127 = vadd.s32 %v123, 1
    %v128 = vsel %vm126, %v127, %v123
    %v129 = vadd.s32 %v124, %v128
    %v130 = vadd.s32 %v129, 536870912
    %v131 = vshrl.u32 %v130, 30
    %v132 = vshll.u32 %v131, 30
    %v133 = vsub.s32 %v129, %v132
    %vm134 = vcmp.lt.s32.totalorder %v133, 0
    %v135 = vsub.s32 0, %v133
    %v136 = vsel %vm134, %v135, %v133
    %v137 = vclz %v136
    %v138 = vsub.s32 %v137, 2
    %vm139 = vcmp.gt.s32.totalorder 0, %v138
    %v140 = vsel %vm139, 0, %v138
    %v141 = vsub.s32 32, %v140
    %v142 = vshll.u32 %v133, %v140
    %v143 = vshrl.u32 %v125, %v141
    %v144 = vor.u32 %v142, %v143
    %v145 = vsub.s32 4294967266, %v140
    %v146 = vadd.s32 %v145, 127
    %v147 = vshll.u32 %v146, 23
    %v148 = vor.u32 4788187, %v147
    %v149 = vand.u32 2147483647, %v148
    %v151 = vcvt.s32.f32 %v144
    %v152 = vmul.f32 %v151, %v149
    %v153 = vxor.u32 %v152, 2147483648
    %v154 = vsel %vm71, %v153, %v152
    %v155 = vsub.s32 4, %v131
    %v156 = vsel %vm71, %v155, %v131
    %v157 = vsel %vm70, %v68, %v154
    %v158 = vsel %vm70, 0, %v156
    %v159 = vcosq.f32.pop %v157
    %v160 = vsinq.f32.pop %v157
    %vm161 = vweird.f32 %v68
    %v162 = vand.u32 %v158, 3
    %vm163 = vcmp.lt.s32.totalorder %v162, 2
    %vm164 = vcmp.eq.s32.totalorder %v162, 0
    %v165 = vxor.u32 %v160, 2147483648
    %v166 = vsel %vm164, %v159, %v165
    %vm167 = vcmp.eq.s32.totalorder %v162, 2
    %v168 = vxor.u32 %v159, 2147483648
    %v169 = vsel %vm167, %v168, %v160
    %v170 = vsel %vm163, %v166, %v169
    %v171 = vsel %vm161, nan, %v170
    %v172 = vmul.f32 %v67, %v171
    %v173 = vmul.f32 %v172, 0.1
    %v174 = vadd.f32 %v173, 1.0
    %v175 = vand.u32 2147483647, %v68
    %vm176 = vcmp.le.f32.partialorder %v175, 0.7853982
    %vm177 = vcmp.lt.s32.totalorder %v68, 0
    %v178 = vand.u32 %v68, 2139095040
    %v179 = vshrl.u32 %v178, 23
    %v180 = vsub.s32 %v179, 127
    %v181 = vand.u32 2147483647, %v68
    %v182 = vand.u32 %v181, 8388607
    %v183 = vor.u32 %v182, 8388608
    %v184 = vsub.s32 0, %v183
    %v185 = vadd.s32 %v180, 1
    %vm186 = vcmp.gt.s32.totalorder %v185, 0
    %v187 = vsel %vm186, %v185, 0
    %v188 = vshrl.u32 %v187, 5
    %v189 = vand.u32 %v187, 31
    %v190 = vsub.s32 32, %v189
    %v191 = vshrl.u32 683565275, %v190
    %v192 = vshll.u32 683565275, %v189
    %v193 = vshrl.u32 2475754826, %v190
    %v194 = vor.u32 %v192, %v193
    %v195 = vshll.u32 2475754826, %v189
    %v196 = vshrl.u32 2131351028, %v190
    %v197 = vor.u32 %v195, %v196
    %v198 = vshll.u32 2131351028, %v189
    %v199 = vshrl.u32 2102212464, %v190
    %v200 = vor.u32 %v198, %v199
    %v201 = vshll.u32 2102212464, %v189
    %v202 = vshrl.u32 920167782, %v190
    %v203 = vor.u32 %v201, %v202
    %v204 = vshll.u32 920167782, %v189
    %v205 = vshrl.u32 1326507024, %v190
    %v206 = vor.u32 %v204, %v205
    %vm207 = vcmp.lt.s32.totalorder %v188, 1
    %vm208 = vcmp.lt.s32.totalorder %v188, 2
    %vm209 = vcmp.lt.s32.totalorder %v188, 3
    %vm210 = vcmp.lt.s32.totalorder %v188, 4
    %v211 = vsel %vm207, %v191, %v194
    %v212 = vsel %vm210, %v200, 2102212464
    %v213 = vsel %vm209, %v197, %v212
    %v214 = vsel %vm208, %v211, %v213
    %v215 = vsel %vm207, %v194, %v197
    %v216 = vsel %vm210, %v203, 920167782
    %v217 = vsel %vm209, %v200, %v216
    %v218 = vsel %vm208, %v215, %v217
    %v219 = vsel %vm207, %v197, %v200
    %v220 = vsel %vm210, %v206, 1326507024
    %v221 = vsel %vm209, %v203, %v220
    %v222 = vsel %vm208, %v219, %v221
    %v223 = vshll.u32 %v183, 8
    %v224 = vmul.u32.u64.compose %v223, %v222
    %v225 = vextract.low.u32 %v224
    %v226 = vextract.high.u32 %v224
    %v227 = vmul.u32.u64.compose %v223, %v218
    %v228 = vextract.low.u32 %v227
    %v229 = vextract.high.u32 %v227
    %v230 = vmul.u32 %v223, %v214
    %v231 = vadd.s32 %v226, %v228
    %vm232 = vc.u32 %v226, %v228
    %v233 = vadd.s32 %v229, 1
    %v234 = vsel %vm232, %v233, %v229
    %v235 = vadd.s32 %v230, %v234
    %v236 = vadd.s32 %v235, 536870912
    %v237 = vshrl.u32 %v236, 30
    %v238 = vshll.u32 %v237, 30
    %v239 = vsub.s32 %v235, %v238
    %vm240 = vcmp.lt.s32.totalorder %v239, 0
    %v241 = vsub.s32 0, %v239
    %v242 = vsel %vm240, %v241, %v239
    %v243 = vclz %v242
    %v244 = vsub.s32 %v243, 2
    %vm245 = vcmp.gt.s32.totalorder 0, %v244
    %v246 = vsel %vm245, 0, %v244
    %v247 = vsub.s32 32, %v246
    %v248 = vshll.u32 %v239, %v246
    %v249 = vshrl.u32 %v231, %v247
    %v250 = vor.u32 %v248, %v249
    %v251 = vsub.s32 4294967266, %v246
    %v252 = vadd.s32 %v251, 127
    %v253 = vshll.u32 %v252, 23
    %v254 = vor.u32 4788187, %v253
    %v255 = vand.u32 2147483647, %v254
    %v257 = vcvt.s32.f32 %v250
    %v258 = vmul.f32 %v257, %v255
    %v259 = vxor.u32 %v258, 2147483648
    %v260 = vsel %vm177, %v259, %v258
    %v261 = vsub.s32 4, %v237
    %v262 = vsel %vm177, %v261, %v237
    %v263 = vsel %vm176, %v68, %v260
    %v264 = vsel %vm176, 0, %v262
    %v265 = vcosq.f32.pop %v263
    %v266 = vsinq.f32.pop %v263
    %vm267 = vweird.f32 %v68
    %v268 = vadd.s32 %v264, 3
    %v269 = vand.u32 %v268, 3
    %vm270 = vcmp.lt.s32.totalorder %v269, 2
    %vm271 = vcmp.eq.s32.totalorder %v269, 0
    %v272 = vxor.u32 %v266, 2147483648
    %v273 = vsel %vm271, %v265, %v272
    %vm274 = vcmp.eq.s32.totalorder %v269, 2
    %v275 = vxor.u32 %v265, 2147483648
    %v276 = vsel %vm274, %v275, %v266
    %v277 = vsel %vm270, %v273, %v276
    %v278 = vsel %vm267, nan, %v277
    %v279 = vmul.f32 %v67, %v278
    %v280 = vmul.f32 %v279, 0.1
    %v281 = vadd.f32 %v280, 1.0
    %v282 = vld [vmem:[#allocation3] sm:$0xff]
    %v283 = vmul.f32 %v282, %v174
    %284 = vst [vmem:[#allocation6] sm:$0xff] %v283
    %v285 = vld [vmem:[#allocation3 + $0x8] sm:$0xff]
    %v286 = vmul.f32 %v285, %v281
    %287 = vst [vmem:[#allocation6 + $0x8] sm:$0xff] %v286
    // Predicated region
    $region14: #{tpu_custom_call.1} parent=1 // pred_check
      _
    $region15: #{tpu_custom_call.1} parent=1 // pred_check_branch
      %289 = sbr.rel (0) target = $region17
    $region16: #{tpu_custom_call.1} parent=1 // pred_region
      %s291 = ssub.s32 256, 256
      %292 = vsyncadd [#allocation5], %s291
      %s293 = sshll.u32 [#allocation6], 4
      %s294 = int_to_ptr.vmem [resolvable:$true] %s293
      %299 = dma.vmem_to_hbm [thread:$0]  %s294, 256, %s2, [#allocation5], 128, 128, 8
    $region17: #{tpu_custom_call.1} parent=1 // pred_fallthru
      _
    // Predicated region
    $region18: #{tpu_custom_call.1} parent=1 // pred_check
      _
    $region19: #{tpu_custom_call.1} parent=1 // pred_check_branch
      %301 = sbr.rel (0) target = $region21
    $region20: #{tpu_custom_call.1} parent=1 // pred_region
      %302 = dma.done [#allocation5], 256
    $region21: #{tpu_custom_call.1} parent=1 // pred_fallthru
      _
    %303 = vsyncpa [#allocation4], 1
    %304 = vsyncpa [#allocation5], 1

</llo_original>
